<compile_context>
chip_gen: v5e
topology: v5e:2x2
jax: 0.10.0
libtpu: 0.0.40
codegen_flags: <defaults>
</compile_context>

<pallas_src>
import functools

import jax
import jax.numpy as jnp
from jax import lax
from jax.experimental import pallas as pl
from jax.experimental.pallas import tpu as pltpu


def _rif_kernel(x_ref, v_ref, z_ref, s_ref, zout_ref, mem_ref, *, v_threshold):
    """Grid = (N // tn, T).  One IF timestep per inner grid step.

    mem_ref is a persistent VMEM scratch holding the membrane potential of the
    current (tn, D) tile; it is zeroed at t == 0 and carried across the inner
    (T) grid axis.  The Lorentz expmap epilogue runs once per tile at t == T-1.
    """
    t = pl.program_id(1)

    # --- reset membrane potential at the start of each tile's time scan -----
    @pl.when(t == 0)
    def _():
        mem_ref[...] = jnp.zeros_like(mem_ref)

    # --- one integrate-and-fire step ----------------------------------------
    mem = mem_ref[...] + x_ref[0].astype(jnp.float32)            # (tn, D)
    spike = mem > v_threshold
    s_ref[0] = spike.astype(s_ref.dtype)                         # exact 0/1
    mem_ref[...] = jnp.where(spike, mem - v_threshold, mem)      # soft reset

    # --- Lorentz expmap (curvature -1) epilogue, once per tile ---------------
    @pl.when(t == pl.num_programs(1) - 1)
    def _():
        v = v_ref[...].astype(jnp.float32)
        z = z_ref[...].astype(jnp.float32)
        # Lorentz inner product <v,v>_L = -v_0^2 + sum_{i>0} v_i^2
        #                               = sum_i v_i^2 - 2 * v_0^2
        vv = jnp.sum(v * v, axis=-1, keepdims=True) - 2.0 * (v[:, :1] * v[:, :1])
        # NOTE: vv can be negative for off-manifold tangent vectors; clamping
        # mirrors the reference (silently floors instead of erroring).
        vv = jnp.maximum(vv, 1e-8)
        inv_vnorm = lax.rsqrt(vv)        # EUP path; replaces sqrt + divide
        vnorm = vv * inv_vnorm           # == sqrt(vv)
        e_pos = jnp.exp(vnorm)           # NOTE: overflows f32 for vnorm > ~88,
        e_neg = jnp.exp(-vnorm)          # same behaviour as jnp.cosh reference.
        cosh_n = 0.5 * (e_pos + e_neg)
        sinh_n = 0.5 * (e_pos - e_neg)
        zout_ref[...] = (cosh_n * z + (sinh_n * inv_vnorm) * v).astype(zout_ref.dtype)


def _choose_tile_n(N, tn_max):
    """Largest multiple of 8 that is <= tn_max and divides N (else N itself)."""
    for cand in range(min(tn_max, N), 7, -1):
        if N % cand == 0 and cand % 8 == 0:
            return cand
    return N


def riemannian_if_forward(x_seq, v_seq, z_seq, v_threshold=1.0, *,
                          tn=512, spike_dtype=jnp.bfloat16,
                          vmem_limit_bytes=48 * 1024 * 1024):
    """Pallas forward pass.  x_seq: [T, N, D], v_seq/z_seq: [N, D].

    Returns:
      s_seq [T, N, D] in `spike_dtype` (values exactly 0/1; widen in the caller
        if float32 is required),
      z_out [N, D] float32 (Lorentz expmap_z(v)).

    `tn` is the sublane tile; it is clamped to a divisor of N.  VMEM usage per
    grid step is T-independent (~9 * tn * D * 4 B with double buffering), so
    large `tn` is safe on v5e/v6e (128 MiB VMEM) and v7x (64 MiB).
    """
    T, N, D = x_seq.shape
    assert v_seq.shape == (N, D) and z_seq.shape == (N, D)
    tile_n = _choose_tile_n(N, tn)
    kernel = functools.partial(_rif_kernel, v_threshold=float(v_threshold))

    out_shape = (
        jax.ShapeDtypeStruct((T, N, D), spike_dtype),    # spike train
        jax.ShapeDtypeStruct((N, D), jnp.float32),       # expmap_z(v)
    )
    grid_spec = pltpu.PrefetchScalarGridSpec(
        num_scalar_prefetch=0,
        grid=(N // tile_n, T),                                     # T innermost
        in_specs=[
            pl.BlockSpec((1, tile_n, D), lambda i, t: (t, i, 0)),  # x[t] tile
            pl.BlockSpec((tile_n, D), lambda i, t: (i, 0)),        # v tile
            pl.BlockSpec((tile_n, D), lambda i, t: (i, 0)),        # z tile
        ],
        out_specs=(
            pl.BlockSpec((1, tile_n, D), lambda i, t: (t, i, 0)),  # spikes
            pl.BlockSpec((tile_n, D), lambda i, t: (i, 0)),        # z_out
        ),
        scratch_shapes=[pltpu.VMEM((tile_n, D), jnp.float32)],     # membrane
    )
    return pl.pallas_call(
        kernel,
        out_shape=out_shape,
        grid_spec=grid_spec,
        compiler_params=pltpu.CompilerParams(
            dimension_semantics=("parallel", "arbitrary"),
            vmem_limit_bytes=vmem_limit_bytes,
        ),
    )(x_seq, v_seq, z_seq)


def _reference(x_seq, v_seq, z_seq, v_threshold=1.0):
    """Plain-JAX reference mirroring IFFunction.forward with Lorentz expmap."""
    mem = jnp.zeros_like(v_seq)
    spikes = []
    for t in range(x_seq.shape[0]):
        mem = mem + x_seq[t]
        sp = (mem > v_threshold).astype(jnp.float32)
        spikes.append(sp)
        mem = mem - v_threshold * sp
    s_seq = jnp.stack(spikes, axis=0)

    D = v_seq.shape[-1]
    sign = jnp.concatenate([-jnp.ones((1,)), jnp.ones((D - 1,))])
    vv = jnp.sum(sign * v_seq * v_seq, axis=-1, keepdims=True)
    vnorm = jnp.sqrt(jnp.maximum(vv, 1e-8))
    z_out = jnp.cosh(vnorm) * z_seq + jnp.sinh(vnorm) * v_seq / vnorm
    return s_seq, z_out


if __name__ == "__main__":
    T, N, D = 8, 16, 128
    key = jax.random.PRNGKey(0)
    kx, kv, kz = jax.random.split(key, 3)
    x_seq = jax.random.normal(kx, (T, N, D), dtype=jnp.float32)
    v_seq = 0.1 * jax.random.normal(kv, (N, D), dtype=jnp.float32)
    z_seq = jax.random.normal(kz, (N, D), dtype=jnp.float32)

    s_seq, z_out = riemannian_if_forward(x_seq, v_seq, z_seq, v_threshold=1.0)
    jax.block_until_ready((s_seq, z_out))

    s_ref, z_ref = _reference(x_seq, v_seq, z_seq, v_threshold=1.0)
    assert s_seq.shape == (T, N, D) and z_out.shape == (N, D)
    assert jnp.array_equal(s_seq.astype(jnp.float32), s_ref)
    assert jnp.allclose(z_out, z_ref, rtol=1e-4, atol=1e-4)

    print("KERNEL_OK")
</pallas_src>

<mosaic_0001>
module attributes {stable_mosaic.version = 11 : i64} {
  func.func @_rif_kernel(%arg0: i32, %arg1: i32, %arg2: memref<1x16x128xf32, #tpu.memory_space<vmem>>, %arg3: memref<16x128xf32, #tpu.memory_space<vmem>>, %arg4: memref<16x128xf32, #tpu.memory_space<vmem>>, %arg5: memref<1x16x128xbf16, #tpu.memory_space<vmem>>, %arg6: memref<16x128xf32, #tpu.memory_space<vmem>>, %arg7: memref<16x128xf32, #tpu.memory_space<vmem>>) attributes {dimension_semantics = [#tpu.dimension_semantics<parallel>, #tpu.dimension_semantics<arbitrary>], iteration_bounds = array<i64: 1, 8>, scalar_prefetch = 0 : i64, scratch_operands = 1 : i64, tpu.core_type = #tpu.core_type<tc>, window_params = [{transform_indices = @transform_0, window_bounds = array<i64: 1, 16, 128>}, {transform_indices = @transform_1, window_bounds = array<i64: 16, 128>}, {transform_indices = @transform_2, window_bounds = array<i64: 16, 128>}, {transform_indices = @transform_3, window_bounds = array<i64: 1, 16, 128>}, {transform_indices = @transform_4, window_bounds = array<i64: 16, 128>}]} {
    %c0_i32 = arith.constant 0 : i32
    %0 = arith.cmpi eq, %arg1, %c0_i32 : i32
    %1 = arith.extui %0 : i1 to i32
    %c0_i32_0 = arith.constant 0 : i32
    %2 = arith.cmpi ne, %1, %c0_i32_0 : i32
    scf.if %2 {
      %cst_12 = arith.constant 0.000000e+00 : f32
      %22 = vector.broadcast %cst_12 : f32 to vector<16x128xf32>
      %c0_13 = arith.constant 0 : index
      %c0_14 = arith.constant 0 : index
      %23 = vector.load %arg7[%c0_13, %c0_14] : memref<16x128xf32, #tpu.memory_space<vmem>>, vector<16x128xf32>
      tpu.vector_store %arg7[%c0_13, %c0_14], %22 {strides = array<i32>} : memref<16x128xf32, #tpu.memory_space<vmem>>, vector<16x128xf32>,
    } else {
    }
    %c0 = arith.constant 0 : index
    %c0_1 = arith.constant 0 : index
    %3 = vector.load %arg7[%c0, %c0_1] : memref<16x128xf32, #tpu.memory_space<vmem>>, vector<16x128xf32>
    %c0_2 = arith.constant 0 : index
    %c0_3 = arith.constant 0 : index
    %c0_4 = arith.constant 0 : index
    %4 = vector.load %arg2[%c0_2, %c0_3, %c0_4] : memref<1x16x128xf32, #tpu.memory_space<vmem>>, vector<1x16x128xf32>
    %5 = vector.shape_cast %4 : vector<1x16x128xf32> to vector<16x128xf32>
    %6 = arith.addf %3, %5 : vector<16x128xf32>
    %cst = arith.constant 1.000000e+00 : f32
    %7 = vector.broadcast %cst : f32 to vector<16x128xf32>
    %8 = arith.cmpf ogt, %6, %7 : vector<16x128xf32>
    %9 = arith.extui %8 : vector<16x128xi1> to vector<16x128xi32>
    %10 = arith.sitofp %9 : vector<16x128xi32> to vector<16x128xf32>
    %11 = arith.truncf %10 : vector<16x128xf32> to vector<16x128xbf16>
    %c0_5 = arith.constant 0 : index
    %c0_6 = arith.constant 0 : index
    %c0_7 = arith.constant 0 : index
    %12 = vector.load %arg5[%c0_5, %c0_6, %c0_7] : memref<1x16x128xbf16, #tpu.memory_space<vmem>>, vector<1x16x128xbf16>
    %13 = vector.shape_cast %12 : vector<1x16x128xbf16> to vector<16x128xbf16>
    %14 = vector.shape_cast %11 : vector<16x128xbf16> to vector<1x16x128xbf16>
    tpu.vector_store %arg5[%c0_5, %c0_6, %c0_7], %14 {strides = array<i32>} : memref<1x16x128xbf16, #tpu.memory_space<vmem>>, vector<1x16x128xbf16>,
    %cst_8 = arith.constant 1.000000e+00 : f32
    %15 = vector.broadcast %cst_8 : f32 to vector<16x128xf32>
    %16 = arith.subf %6, %15 : vector<16x128xf32>
    %17 = arith.select %8, %16, %6 : vector<16x128xi1>, vector<16x128xf32>
    %c0_9 = arith.constant 0 : index
    %c0_10 = arith.constant 0 : index
    %18 = vector.load %arg7[%c0_9, %c0_10] : memref<16x128xf32, #tpu.memory_space<vmem>>, vector<16x128xf32>
    tpu.vector_store %arg7[%c0_9, %c0_10], %17 {strides = array<i32>} : memref<16x128xf32, #tpu.memory_space<vmem>>, vector<16x128xf32>,
    %c7_i32 = arith.constant 7 : i32
    %19 = arith.cmpi eq, %arg1, %c7_i32 : i32
    %20 = arith.extui %19 : i1 to i32
    %c0_i32_11 = arith.constant 0 : i32
    %21 = arith.cmpi ne, %20, %c0_i32_11 : i32
    scf.if %21 {
      %c0_12 = arith.constant 0 : index
      %c0_13 = arith.constant 0 : index
      %22 = vector.load %arg3[%c0_12, %c0_13] : memref<16x128xf32, #tpu.memory_space<vmem>>, vector<16x128xf32>
      %c0_14 = arith.constant 0 : index
      %c0_15 = arith.constant 0 : index
      %23 = vector.load %arg4[%c0_14, %c0_15] : memref<16x128xf32, #tpu.memory_space<vmem>>, vector<16x128xf32>
      %24 = arith.mulf %22, %22 : vector<16x128xf32>
      %cst_16 = arith.constant dense<0.000000e+00> : vector<16xf32>
      %25 = vector.multi_reduction <add>, %24, %cst_16 [1] : vector<16x128xf32> to vector<16xf32>
      %26 = vector.shape_cast %25 : vector<16xf32> to vector<16x1xf32>
      %27 = vector.extract_strided_slice %22 {offsets = [0, 0], sizes = [16, 1], strides = [1, 1]} : vector<16x128xf32> to vector<16x1xf32>
      %28 = vector.extract_strided_slice %22 {offsets = [0, 0], sizes = [16, 1], strides = [1, 1]} : vector<16x128xf32> to vector<16x1xf32>
      %29 = arith.mulf %27, %28 : vector<16x1xf32>
      %cst_17 = arith.constant 2.000000e+00 : f32
      %30 = vector.broadcast %cst_17 : f32 to vector<16x1xf32>
      %31 = arith.mulf %30, %29 : vector<16x1xf32>
      %32 = arith.subf %26, %31 : vector<16x1xf32>
      %cst_18 = arith.constant 9.99999993E-9 : f32
      %33 = vector.broadcast %cst_18 : f32 to vector<16x1xf32>
      %34 = arith.maximumf %32, %33 : vector<16x1xf32>
      %35 = math.rsqrt %34 : vector<16x1xf32>
      %36 = arith.mulf %34, %35 : vector<16x1xf32>
      %37 = math.exp %36 : vector<16x1xf32>
      %cst_19 = arith.constant 0.000000e+00 : f32
      %38 = vector.broadcast %cst_19 : f32 to vector<16x1xf32>
      %39 = arith.subf %38, %36 : vector<16x1xf32>
      %40 = math.exp %39 : vector<16x1xf32>
      %41 = arith.addf %37, %40 : vector<16x1xf32>
      %cst_20 = arith.constant 5.000000e-01 : f32
      %42 = vector.broadcast %cst_20 : f32 to vector<16x1xf32>
      %43 = arith.mulf %42, %41 : vector<16x1xf32>
      %44 = arith.subf %37, %40 : vector<16x1xf32>
      %cst_21 = arith.constant 5.000000e-01 : f32
      %45 = vector.broadcast %cst_21 : f32 to vector<16x1xf32>
      %46 = arith.mulf %45, %44 : vector<16x1xf32>
      %47 = vector.broadcast %43 : vector<16x1xf32> to vector<16x128xf32>
      %48 = arith.mulf %47, %23 : vector<16x128xf32>
      %49 = arith.mulf %46, %35 : vector<16x1xf32>
      %50 = vector.broadcast %49 : vector<16x1xf32> to vector<16x128xf32>
      %51 = arith.mulf %50, %22 : vector<16x128xf32>
      %52 = arith.addf %48, %51 : vector<16x128xf32>
      %c0_22 = arith.constant 0 : index
      %c0_23 = arith.constant 0 : index
      %53 = vector.load %arg6[%c0_22, %c0_23] : memref<16x128xf32, #tpu.memory_space<vmem>>, vector<16x128xf32>
      tpu.vector_store %arg6[%c0_22, %c0_23], %52 {strides = array<i32>} : memref<16x128xf32, #tpu.memory_space<vmem>>, vector<16x128xf32>,
    } else {
    }
    return
  }
  func.func @transform_0(%arg0: i32, %arg1: i32) -> (i32, i32, i32) {
    %c0_i32 = arith.constant 0 : i32
    %c0_i32_0 = arith.constant 0 : i32
    return %arg1, %arg0, %c0_i32 : i32, i32, i32
  }
  func.func @transform_1(%arg0: i32, %arg1: i32) -> (i32, i32) {
    %c0_i32 = arith.constant 0 : i32
    %c0_i32_0 = arith.constant 0 : i32
    return %arg0, %c0_i32 : i32, i32
  }
  func.func @transform_2(%arg0: i32, %arg1: i32) -> (i32, i32) {
    %c0_i32 = arith.constant 0 : i32
    %c0_i32_0 = arith.constant 0 : i32
    return %arg0, %c0_i32 : i32, i32
  }
  func.func @transform_3(%arg0: i32, %arg1: i32) -> (i32, i32, i32) {
    %c0_i32 = arith.constant 0 : i32
    %c0_i32_0 = arith.constant 0 : i32
    return %arg1, %arg0, %c0_i32 : i32, i32, i32
  }
  func.func @transform_4(%arg0: i32, %arg1: i32) -> (i32, i32) {
    %c0_i32 = arith.constant 0 : i32
    %c0_i32_0 = arith.constant 0 : i32
    return %arg0, %c0_i32 : i32, i32
  }
}

</mosaic_0001>

<llo_original>
// kernel: tpu_custom_call.1
$region0: #{tpu_custom_call.1}
  #allocation0 [shape = 'u32[]', space=smem, size = 0x4, offset = 0x4, fixed_abs, tag = 'smem constant byte address 0x4 - core index']
  #allocation1 [shape = 'u32[72,128]{1,0:T(1,128)}', space=vmem, size = 0x9000, scoped, tag = 'internal scratch']
  #allocation2 [shape = 'f32[16,128]{1,0:T(8,128)}', space=vmem, size = 0x2000, scoped, tag = 'scratch operand']
  %s0 = inlined_call_operand.hbm [shape: f32[8,16,128], index: 0, kind: input, shape index: {}]
  %s1 = inlined_call_operand.hbm [shape: f32[16,128], index: 1, kind: input, shape index: {}]
  %s2 = inlined_call_operand.hbm [shape: f32[16,128], index: 2, kind: input, shape index: {}]
  %s3 = inlined_call_operand.hbm [shape: bf16[8,16,128], index: 3, kind: output, shape index: {0}]
  %s4 = inlined_call_operand.hbm [shape: f32[16,128], index: 4, kind: output, shape index: {1}]
  %5 = xla_tuple %s3, %s4
  %s6 = sld [smem:[#allocation0]]
  $region73: #{tpu_custom_call.1} parent=0
    _
  %s8 = ssub.s32 1, %s6
  %s9 = scalar_select 0, %s8, %s6
  $region1: #{tpu_custom_call.1} parent=0
    #allocation3 [shape = 'u8[16384]{0}', space=vmem, size = 0x4000, scoped, tag = 'input window, operand 0']
    #allocation4 [shape = 's32[2]{0}', space=sflag, size = 0x8, scoped, tag = 'scoped memory for tpu_custom_call.1']
    #allocation5 [shape = 's32[2]{0}', space=sflag, size = 0x8, scoped, tag = 'scoped memory for tpu_custom_call.1']
    #allocation6 [shape = 'u8[8192]{0}', space=vmem, size = 0x2000, scoped, tag = 'input window, operand 1, single buffered']
    #allocation7 [shape = 's32[1]{0}', space=sflag, size = 0x4, scoped, tag = 'scoped memory for tpu_custom_call.1']
    #allocation8 [shape = 'u8[8192]{0}', space=vmem, size = 0x2000, scoped, tag = 'input window, operand 2, single buffered']
    #allocation9 [shape = 'u8[8192]{0}', space=vmem, size = 0x2000, scoped, tag = 'output window, operand 0']
    #allocation10 [shape = 'u8[8192]{0}', space=vmem, size = 0x2000, scoped, tag = 'output window, operand 1, single buffered']
    #allocation11 [shape = 's32[1]{0}', space=sflag, size = 0x4, scoped, tag = 'scoped memory for tpu_custom_call.1']
    %10 = vsyncpa [#allocation4], 0
    %s11 = scalar_lea.sflag [#allocation4], 1
    %12 = vsyncpa %s11, 0
    %13 = vsyncpa [#allocation7], 0
    %14 = vsyncpa [#allocation5], 0
    %s15 = scalar_lea.sflag [#allocation5], 1
    %16 = vsyncpa %s15, 0
    %17 = vsyncpa [#allocation11], 0
    loop: start=0, step=1, limit=10
    $region2: #{tpu_custom_call.1} parent=1 // loop_pre_header
      _
    $region3: #{tpu_custom_call.1} parent=1 // loop_header
      %s19 = sphi 0, %s23
      %p20 = scmp.ge.s32.totalorder %s19, 10
      %s26 = sphi 0, %s38
      %s27 = sphi 0, %s34
      %s28 = sphi 0, %s26
      %s29 = sphi 0, %s27
      %s30 = sphi 0, %s28
      %s31 = sphi 0, %s29
      %s43 = sphi 0, %s45
      %s46 = sphi 0, %s43
      %s47 = sphi 0, %s46
      %s63 = sphi 0, %s47
      %s69 = sphi 0, %s71
      %s72 = sphi 0, %s69
      %s73 = sphi 0, %s72
      %s89 = sphi 0, %s73
      %s95 = sphi 0, %s97
      %s98 = sphi 0, %s95
      %s99 = sphi 0, %s98
      %s115 = sphi 0, %s99
      %s123 = sphi 0, %s125
      %s126 = sphi 0, %s123
      %s127 = sphi 0, %s126
      %s143 = sphi 0, %s127
      %s149 = sphi 0, %s151
      %s152 = sphi 0, %s149
      %s153 = sphi 0, %s152
      %s169 = sphi 0, %s153
    $region4: #{tpu_custom_call.1} parent=1 // loop_header_branch
      %22 = sbr.rel (%p20) target = $region8
    $region5: #{tpu_custom_call.1} parent=1 // loop_body
      %s24 = ssub.s32 %s19, 1
      %s25 = ssub.s32 %s19, 2
      %s32 = sadd.s32 1, %s27
      %p33 = scmp.ge.s32.totalorder %s32, 8
      %s34 = scalar_select %p33, 0, %s32
      %s35 = sadd.s32 1, %s26
      %s36 = scalar_select %p33, %s35, %s26
      %p37 = scmp.ge.s32.totalorder %s36, 1
      %s38 = scalar_select %p37, 0, %s36
      %s39 = ssub.s32 %s27, %s34
      %s40 = ssub.s32 %s26, %s38
      %s41 = sor.u32 %s39, %s40
      %p42 = scmp.eq.s32.totalorder %s41, 0
      %s44 = sadd.s32 %s43, 1
      %s45 = scalar_select %p42, %s43, %s44
      %p48 = pneg %p42
      %p49 = scmp.eq.s32.totalorder %s19, 7
      %p50 = por %p48, %p49
      %p51 = scmp.ne.s32.totalorder %s43, %s46
      %p52 = scmp.eq.s32.totalorder %s19, 0
      %p53 = por %p51, %p52
      %p54 = scmp.ne.s32.totalorder %s43, %s46
      %p55 = scmp.eq.s32.totalorder %s24, 7
      %p56 = por %p54, %p55
      %p57 = scmp.ne.s32.totalorder %s46, %s47
      %p58 = scmp.eq.s32.totalorder %s24, 0
      %p59 = por %p57, %p58
      %p60 = scmp.ne.s32.totalorder %s46, %s47
      %p61 = scmp.eq.s32.totalorder %s25, 7
      %p62 = por %p60, %p61
      %p64 = scmp.ne.s32.totalorder %s47, %s63
      %p65 = scmp.eq.s32.totalorder %s25, 0
      %p66 = por %p64, %p65
      %s67 = ssub.s32 %s26, %s38
      %p68 = scmp.eq.s32.totalorder %s67, 0
      %s70 = sadd.s32 %s69, 1
      %s71 = scalar_select %p68, %s69, %s70
      %p74 = pneg %p68
      %p75 = scmp.eq.s32.totalorder %s19, 7
      %p76 = por %p74, %p75
      %p77 = scmp.ne.s32.totalorder %s69, %s72
      %p78 = scmp.eq.s32.totalorder %s19, 0
      %p79 = por %p77, %p78
      %p80 = scmp.ne.s32.totalorder %s69, %s72
      %p81 = scmp.eq.s32.totalorder %s24, 7
      %p82 = por %p80, %p81
      %p83 = scmp.ne.s32.totalorder %s72, %s73
      %p84 = scmp.eq.s32.totalorder %s24, 0
      %p85 = por %p83, %p84
      %p86 = scmp.ne.s32.totalorder %s72, %s73
      %p87 = scmp.eq.s32.totalorder %s25, 7
      %p88 = por %p86, %p87
      %p90 = scmp.ne.s32.totalorder %s73, %s89
      %p91 = scmp.eq.s32.totalorder %s25, 0
      %p92 = por %p90, %p91
      %s93 = ssub.s32 %s26, %s38
      %p94 = scmp.eq.s32.totalorder %s93, 0
      %s96 = sadd.s32 %s95, 1
      %s97 = scalar_select %p94, %s95, %s96
      %p100 = pneg %p94
      %p101 = scmp.eq.s32.totalorder %s19, 7
      %p102 = por %p100, %p101
      %p103 = scmp.ne.s32.totalorder %s95, %s98
      %p104 = scmp.eq.s32.totalorder %s19, 0
      %p105 = por %p103, %p104
      %p106 = scmp.ne.s32.totalorder %s95, %s98
      %p107 = scmp.eq.s32.totalorder %s24, 7
      %p108 = por %p106, %p107
      %p109 = scmp.ne.s32.totalorder %s98, %s99
      %p110 = scmp.eq.s32.totalorder %s24, 0
      %p111 = por %p109, %p110
      %p112 = scmp.ne.s32.totalorder %s98, %s99
      %p113 = scmp.eq.s32.totalorder %s25, 7
      %p114 = por %p112, %p113
      %p116 = scmp.ne.s32.totalorder %s99, %s115
      %p117 = scmp.eq.s32.totalorder %s25, 0
      %p118 = por %p116, %p117
      %s119 = ssub.s32 %s27, %s34
      %s120 = ssub.s32 %s26, %s38
      %s121 = sor.u32 %s119, %s120
      %p122 = scmp.eq.s32.totalorder %s121, 0
      %s124 = sadd.s32 %s123, 1
      %s125 = scalar_select %p122, %s123, %s124
      %p128 = pneg %p122
      %p129 = scmp.eq.s32.totalorder %s19, 7
      %p130 = por %p128, %p129
      %p131 = scmp.ne.s32.totalorder %s123, %s126
      %p132 = scmp.eq.s32.totalorder %s19, 0
      %p133 = por %p131, %p132
      %p134 = scmp.ne.s32.totalorder %s123, %s126
      %p135 = scmp.eq.s32.totalorder %s24, 7
      %p136 = por %p134, %p135
      %p137 = scmp.ne.s32.totalorder %s126, %s127
      %p138 = scmp.eq.s32.totalorder %s24, 0
      %p139 = por %p137, %p138
      %p140 = scmp.ne.s32.totalorder %s126, %s127
      %p141 = scmp.eq.s32.totalorder %s25, 7
      %p142 = por %p140, %p141
      %p144 = scmp.ne.s32.totalorder %s127, %s143
      %p145 = scmp.eq.s32.totalorder %s25, 0
      %p146 = por %p144, %p145
      %s147 = ssub.s32 %s26, %s38
      %p148 = scmp.eq.s32.totalorder %s147, 0
      %s150 = sadd.s32 %s149, 1
      %s151 = scalar_select %p148, %s149, %s150
      %p154 = pneg %p148
      %p155 = scmp.eq.s32.totalorder %s19, 7
      %p156 = por %p154, %p155
      %p157 = scmp.ne.s32.totalorder %s149, %s152
      %p158 = scmp.eq.s32.totalorder %s19, 0
      %p159 = por %p157, %p158
      %p160 = scmp.ne.s32.totalorder %s149, %s152
      %p161 = scmp.eq.s32.totalorder %s24, 7
      %p162 = por %p160, %p161
      %p163 = scmp.ne.s32.totalorder %s152, %s153
      %p164 = scmp.eq.s32.totalorder %s24, 0
      %p165 = por %p163, %p164
      %p166 = scmp.ne.s32.totalorder %s152, %s153
      %p167 = scmp.eq.s32.totalorder %s25, 7
      %p168 = por %p166, %p167
      %p170 = scmp.ne.s32.totalorder %s153, %s169
      %p171 = scmp.eq.s32.totalorder %s25, 0
      %p172 = por %p170, %p171
      %p173 = scmp.le.s32.totalorder 1, %s19
      %p174 = scmp.lt.s32.totalorder %s19, 9
      %p175 = pnand %p173, %p174
      %p176 = pneg %p175
      // Predicated region
      $region9: #{tpu_custom_call.1} parent=5 // pred_check
        _
      $region10: #{tpu_custom_call.1} parent=5 // pred_check_branch
        %178 = sbr.rel (%p175) target = $region12
      $region11: #{tpu_custom_call.1} parent=5 // pred_region
        %s179 = ssub.s32 %s19, 1
        // Predicated region
        $region13: #{tpu_custom_call.1} parent=11 // pred_check
          %p180 = pneg %p85
        $region14: #{tpu_custom_call.1} parent=11 // pred_check_branch
          %182 = sbr.rel (%p180) target = $region16
        $region15: #{tpu_custom_call.1} parent=11 // pred_region
          %s183 = smul.u32 2, %s28
          %185 = vsyncadd [#allocation7], 0
          %s186 = smul.addr %s183, 8
          %s187 = scalar_lea.hbm %s1, %s186
          %s188 = sshll.u32 %s187, 4
          %s189 = int_to_ptr.hbm [resolvable:$true] %s188
          %s190 = sshll.u32 [#allocation6], 4
          %s191 = int_to_ptr.vmem [resolvable:$true] %s190
          %196 = dma.hbm_to_vmem [thread:$0]  %s189, 256, %s191, [#allocation7], 128, 128, 8
        $region16: #{tpu_custom_call.1} parent=11 // pred_fallthru
          _
        // Predicated region
        $region17: #{tpu_custom_call.1} parent=11 // pred_check
          %p197 = pneg %p111
        $region18: #{tpu_custom_call.1} parent=11 // pred_check_branch
          %199 = sbr.rel (%p197) target = $region20
        $region19: #{tpu_custom_call.1} parent=11 // pred_region
          %s200 = smul.u32 2, %s28
          %202 = vsyncadd [#allocation7], 0
          %s203 = smul.addr %s200, 8
          %s204 = scalar_lea.hbm %s2, %s203
          %s205 = sshll.u32 %s204, 4
          %s206 = int_to_ptr.hbm [resolvable:$true] %s205
          %s207 = sshll.u32 [#allocation8], 4
          %s208 = int_to_ptr.vmem [resolvable:$true] %s207
          %213 = dma.hbm_to_vmem [thread:$0]  %s206, 256, %s208, [#allocation7], 128, 128, 8
        $region20: #{tpu_custom_call.1} parent=11 // pred_fallthru
          _
      $region12: #{tpu_custom_call.1} parent=5 // pred_fallthru
        _
      %p214 = scmp.lt.s32.totalorder %s19, 8
      // Predicated region
      $region21: #{tpu_custom_call.1} parent=5 // pred_check
        %p215 = pneg %p214
      $region22: #{tpu_custom_call.1} parent=5 // pred_check_branch
        %217 = sbr.rel (%p215) target = $region24
      $region23: #{tpu_custom_call.1} parent=5 // pred_region
        // Predicated region
        $region25: #{tpu_custom_call.1} parent=23 // pred_check
          %p218 = pneg %p53
        $region26: #{tpu_custom_call.1} parent=23 // pred_check_branch
          %220 = sbr.rel (%p218) target = $region28
        $region27: #{tpu_custom_call.1} parent=23 // pred_region
          %s221 = sand.u32 %s43, 1
          %s222 = scalar_lea.sflag [#allocation4], %s221
          %s223 = sand.u32 %s43, 1
          %s224 = smul.addr %s223, 16
          %s225 = scalar_lea.vmem [#allocation3], %s224
          %s226 = smul.u32 2, %s26
          %228 = vsyncadd %s222, 0
          %s229 = smul.addr %s27, 2
          %s230 = sadd.s32 %s226, %s229
          %s231 = smul.addr %s230, 8
          %s232 = scalar_lea.hbm %s0, %s231
          %s233 = sshll.u32 %s232, 4
          %s234 = int_to_ptr.hbm [resolvable:$true] %s233
          %s235 = sshll.u32 %s225, 4
          %s236 = int_to_ptr.vmem [resolvable:$true] %s235
          %241 = dma.hbm_to_vmem [thread:$0]  %s234, 256, %s236, %s222, 128, 128, 8
        $region28: #{tpu_custom_call.1} parent=23 // pred_fallthru
          _
      $region24: #{tpu_custom_call.1} parent=5 // pred_fallthru
        _
      %p242 = scmp.le.s32.totalorder 1, %s19
      %p243 = scmp.lt.s32.totalorder %s19, 9
      %p244 = pnand %p242, %p243
      %p245 = pneg %p244
      // Predicated region
      $region29: #{tpu_custom_call.1} parent=5 // pred_check
        _
      $region30: #{tpu_custom_call.1} parent=5 // pred_check_branch
        %247 = sbr.rel (%p244) target = $region32
      $region31: #{tpu_custom_call.1} parent=5 // pred_region
        %s248 = ssub.s32 %s19, 1
        %s249 = sand.u32 %s46, 1
        %s250 = scalar_lea.sflag [#allocation4], %s249
        %s251 = sand.u32 %s46, 1
        %s252 = smul.addr %s251, 16
        %s253 = scalar_lea.vmem [#allocation3], %s252
        // Predicated region
        $region33: #{tpu_custom_call.1} parent=31 // pred_check
          %p254 = pneg %p59
        $region34: #{tpu_custom_call.1} parent=31 // pred_check_branch
          %256 = sbr.rel (%p254) target = $region36
        $region35: #{tpu_custom_call.1} parent=31 // pred_region
          %258 = dma.done %s250, 256
        $region36: #{tpu_custom_call.1} parent=31 // pred_fallthru
          _
        // Predicated region
        $region37: #{tpu_custom_call.1} parent=31 // pred_check
          %p259 = pneg %p85
        $region38: #{tpu_custom_call.1} parent=31 // pred_check_branch
          %261 = sbr.rel (%p259) target = $region40
        $region39: #{tpu_custom_call.1} parent=31 // pred_region
          %263 = dma.done [#allocation7], 256
        $region40: #{tpu_custom_call.1} parent=31 // pred_fallthru
          _
        // Predicated region
        $region41: #{tpu_custom_call.1} parent=31 // pred_check
          %p264 = pneg %p111
        $region42: #{tpu_custom_call.1} parent=31 // pred_check_branch
          %266 = sbr.rel (%p264) target = $region44
        $region43: #{tpu_custom_call.1} parent=31 // pred_region
          %268 = dma.done [#allocation7], 256
        $region44: #{tpu_custom_call.1} parent=31 // pred_fallthru
          _
        %s269 = sand.u32 %s46, 1
        %s270 = scalar_lea.sflag [#allocation4], %s269
        %s271 = sand.u32 %s46, 1
        %s272 = smul.addr %s271, 16
        %s273 = scalar_lea.vmem [#allocation3], %s272
        %p274 = pneg %p59
        %p275 = pneg %p56
        %p276 = pneg %p85
        %p277 = pneg %p82
        %p278 = pneg %p111
        %p279 = pneg %p108
        %p280 = pneg %p139
        %p281 = pneg %p136
        %s282 = sand.u32 %s126, 1
        %s283 = scalar_lea.sflag [#allocation5], %s282
        %s284 = sand.u32 %s126, 1
        %s285 = smul.addr %s284, 8
        %s286 = scalar_lea.vmem [#allocation9], %s285
        %p287 = pneg %p165
        %p288 = pneg %p162
        %s289 = smul.u32 2, %s28
        %s290 = smul.u32 2, %s28
        %s291 = smul.u32 2, %s28
        %s292 = smul.u32 2, %s28
        %s293 = smul.u32 2, %s28
        %p294 = scmp.eq.s32.totalorder %s29, 0
        // Predicated region
        $region45: #{tpu_custom_call.1} parent=31 // pred_check
          %p295 = pneg %p294
        $region46: #{tpu_custom_call.1} parent=31 // pred_check_branch
          %297 = sbr.rel (%p295) target = $region48
        $region47: #{tpu_custom_call.1} parent=31 // pred_region
          %298 = vst [vmem:[#allocation2] sm:$0xff] 0.0
          %299 = vst [vmem:[#allocation2 + $0x8] sm:$0xff] 0.0
        $region48: #{tpu_custom_call.1} parent=31 // pred_fallthru
          _
        %v300 = vld [vmem:[#allocation2] sm:$0xff]
        %v301 = vld [vmem:[#allocation2 + $0x8] sm:$0xff]
        %v302 = vld [vmem:[%s253] sm:$0xff]
        %v303 = vld [vmem:[%s253 + $0x8] sm:$0xff]
        %v304 = vadd.f32 %v300, %v302
        %v305 = vadd.f32 %v301, %v303
        %vm306 = vcmp.gt.f32.partialorder %v304, 1.0
        %vm307 = vcmp.gt.f32.partialorder %v305, 1.0
        %v308 = vsel %vm306, 1, 0
        %v309 = vsel %vm307, 1, 0
        %v310 = vcvt.s32.f32 %v308
        %v311 = vcvt.s32.f32 %v309
        %v312 = vpack.c.bf16 %v310, %v310
        %v313 = vpack.c.bf16 %v311, %v311
        %314 = vst [vmem:[%s286] sm:$0xf] %v312
        %315 = vst [vmem:[%s286 + $0x4] sm:$0xf] %v313
        %v316 = vsub.f32 %v304, 1.0
        %v317 = vsub.f32 %v305, 1.0
        %v318 = vsel %vm306, %v316, %v304
        %v319 = vsel %vm307, %v317, %v305
        %320 = vst [vmem:[#allocation2] sm:$0xff] %v318
        %321 = vst [vmem:[#allocation2 + $0x8] sm:$0xff] %v319
        %p322 = scmp.eq.s32.totalorder %s29, 7
        // Predicated region
        $region49: #{tpu_custom_call.1} parent=31 // pred_check
          %p323 = pneg %p322
        $region50: #{tpu_custom_call.1} parent=31 // pred_check_branch
          %325 = sbr.rel (%p323) target = $region52
        $region51: #{tpu_custom_call.1} parent=31 // pred_region
          %v326 = vld [vmem:[#allocation6] sm:$0xff]
          %v327 = vld [vmem:[#allocation6 + $0x8] sm:$0xff]
          %v328 = vld [vmem:[#allocation8] sm:$0xff]
          %v329 = vld [vmem:[#allocation8 + $0x8] sm:$0xff]
          %v330 = vmul.f32 %v326, %v326
          %v331 = vmul.f32 %v327, %v327
          %332 = vadd.xlane.f32.xlu0 %v330
          %v333 = vpop.xlane.xlu0 %332
          %334 = vadd.xlane.f32.xlu0 %v331
          %v335 = vpop.xlane.xlu0 %334
          %v336 = vmul.f32 %v330, 2.0
          %v337 = vmul.f32 %v331, 2.0
          %v338 = vsub.f32 %v333, %v336
          %v339 = vsub.f32 %v335, %v337
          %v340 = vmax.f32 %v338, 1e-08
          %v341 = vmax.f32 %v339, 1e-08
          %v342 = vrsqrt.pop %v340
          %v343 = vmul.f32 %v342, %v340
          %v344 = vmul.f32 %v343, %v342
          %v345 = vmul.f32 0.5, %v344
          %v346 = vsub.f32 1.5, %v345
          %v347 = vmul.f32 %v342, %v346
          %vm348 = vweird.f32 %v340
          %vm349 = vweird.f32 %v342
          %vm350 = vmor %vm348, %vm349
          %v351 = vsel %vm350, %v342, %v347
          %v352 = vrsqrt.pop %v341
          %v353 = vmul.f32 %v352, %v341
          %v354 = vmul.f32 %v353, %v352
          %v355 = vmul.f32 0.5, %v354
          %v356 = vsub.f32 1.5, %v355
          %v357 = vmul.f32 %v352, %v356
          %vm358 = vweird.f32 %v341
          %vm359 = vweird.f32 %v352
          %vm360 = vmor %vm358, %vm359
          %v361 = vsel %vm360, %v352, %v357
          %v362 = vmul.f32 %v340, %v351
          %v363 = vmul.f32 %v341, %v361
          %v364 = vmul.f32 %v362, 1.442695
          %v365 = vpow.pop %v364
          %v366 = vmul.f32 %v363, 1.442695
          %v367 = vpow.pop %v366
          %v368 = vsub.f32 0.0, %v362
          %v369 = vsub.f32 0.0, %v363
          %v370 = vmul.f32 %v368, 1.442695
          %v371 = vpow.pop %v370
          %v372 = vmul.f32 %v369, 1.442695
          %v373 = vpow.pop %v372
          %v374 = vadd.f32 %v365, %v371
          %v375 = vadd.f32 %v367, %v373
          %v376 = vmul.f32 %v374, 0.5
          %v377 = vmul.f32 %v375, 0.5
          %v378 = vsub.f32 %v365, %v371
          %v379 = vsub.f32 %v367, %v373
          %v380 = vmul.f32 %v378, 0.5
          %v381 = vmul.f32 %v379, 0.5
          %383 = vset.pattern.permute.xlu0 0
          %384 = vperm.xlu0 %383, %v376
          %v385 = vpop.permute.xlu0 %384
          %388 = vset.pattern.permute.xlu0 0
          %389 = vperm.xlu0 %388, %v377
          %v390 = vpop.permute.xlu0 %389
          %v392 = vmul.f32 %v385, %v328
          %v393 = vmul.f32 %v390, %v329
          %v394 = vmul.f32 %v380, %v351
          %v395 = vmul.f32 %v381, %v361
          %397 = vset.pattern.permute.xlu0 0
          %398 = vperm.xlu0 %397, %v394
          %v399 = vpop.permute.xlu0 %398
          %402 = vset.pattern.permute.xlu0 0
          %403 = vperm.xlu0 %402, %v395
          %v404 = vpop.permute.xlu0 %403
          %v406 = vmul.f32 %v399, %v326
          %v407 = vmul.f32 %v404, %v327
          %v408 = vadd.f32 %v392, %v406
          %v409 = vadd.f32 %v393, %v407
          %410 = vst [vmem:[#allocation10] sm:$0xff] %v408
          %411 = vst [vmem:[#allocation10 + $0x8] sm:$0xff] %v409
        $region52: #{tpu_custom_call.1} parent=31 // pred_fallthru
          _
        %s412 = sand.u32 %s126, 1
        %s413 = scalar_lea.sflag [#allocation5], %s412
        %s414 = sand.u32 %s126, 1
        %s415 = smul.addr %s414, 8
        %s416 = scalar_lea.vmem [#allocation9], %s415
        // Predicated region
        $region53: #{tpu_custom_call.1} parent=31 // pred_check
          %p417 = pneg %p136
        $region54: #{tpu_custom_call.1} parent=31 // pred_check_branch
          %419 = sbr.rel (%p417) target = $region56
        $region55: #{tpu_custom_call.1} parent=31 // pred_region
          %s420 = smul.u32 2, %s28
          %422 = vsyncadd %s413, 0
          %s423 = smul.addr %s29, 2
          %s424 = sadd.s32 %s420, %s423
          %s425 = smul.addr %s424, 4
          %s426 = scalar_lea.hbm %s3, %s425
          %s427 = sshll.u32 %s416, 4
          %s428 = int_to_ptr.vmem [resolvable:$true] %s427
          %s429 = sshll.u32 %s426, 4
          %s430 = int_to_ptr.hbm [resolvable:$true] %s429
          %435 = dma.vmem_to_hbm [thread:$0]  %s428, 128, %s430, %s413, 64, 64, 4
        $region56: #{tpu_custom_call.1} parent=31 // pred_fallthru
          _
        // Predicated region
        $region57: #{tpu_custom_call.1} parent=31 // pred_check
          %p436 = pneg %p162
        $region58: #{tpu_custom_call.1} parent=31 // pred_check_branch
          %438 = sbr.rel (%p436) target = $region60
        $region59: #{tpu_custom_call.1} parent=31 // pred_region
          %s439 = smul.u32 2, %s28
          %441 = vsyncadd [#allocation11], 0
          %s442 = smul.addr %s439, 8
          %s443 = scalar_lea.hbm %s4, %s442
          %s444 = sshll.u32 [#allocation10], 4
          %s445 = int_to_ptr.vmem [resolvable:$true] %s444
          %s446 = sshll.u32 %s443, 4
          %s447 = int_to_ptr.hbm [resolvable:$true] %s446
          %452 = dma.vmem_to_hbm [thread:$0]  %s445, 256, %s447, [#allocation11], 128, 128, 8
        $region60: #{tpu_custom_call.1} parent=31 // pred_fallthru
          _
        // Predicated region
        $region61: #{tpu_custom_call.1} parent=31 // pred_check
          %p453 = pneg %p162
        $region62: #{tpu_custom_call.1} parent=31 // pred_check_branch
          %455 = sbr.rel (%p453) target = $region64
        $region63: #{tpu_custom_call.1} parent=31 // pred_region
          %457 = dma.done [#allocation11], 256
        $region64: #{tpu_custom_call.1} parent=31 // pred_fallthru
          _
      $region32: #{tpu_custom_call.1} parent=5 // pred_fallthru
        _
      %p458 = scmp.le.s32.totalorder 2, %s19
      // Predicated region
      $region65: #{tpu_custom_call.1} parent=5 // pred_check
        %p459 = pneg %p458
      $region66: #{tpu_custom_call.1} parent=5 // pred_check_branch
        %461 = sbr.rel (%p459) target = $region68
      $region67: #{tpu_custom_call.1} parent=5 // pred_region
        %s462 = ssub.s32 %s19, 2
        // Predicated region
        $region69: #{tpu_custom_call.1} parent=67 // pred_check
          %p463 = pneg %p142
        $region70: #{tpu_custom_call.1} parent=67 // pred_check_branch
          %465 = sbr.rel (%p463) target = $region72
        $region71: #{tpu_custom_call.1} parent=67 // pred_region
          %s466 = sand.u32 %s127, 1
          %s467 = scalar_lea.sflag [#allocation5], %s466
          %s468 = sand.u32 %s127, 1
          %s469 = smul.addr %s468, 8
          %s470 = scalar_lea.vmem [#allocation9], %s469
          %472 = dma.done %s467, 128
        $region72: #{tpu_custom_call.1} parent=67 // pred_fallthru
          _
      $region68: #{tpu_custom_call.1} parent=5 // pred_fallthru
        _
    $region6: #{tpu_custom_call.1} parent=1 // loop_footer
      %s23 = sadd.s32 1, %s19
    $region7: #{tpu_custom_call.1} parent=1 // loop_footer_branch
      %18 = sbr.rel target = $region3
    $region8: #{tpu_custom_call.1} parent=1 // loop_exit
      _
    %473 = vsyncpa [#allocation4], 1
    %s474 = scalar_lea.sflag [#allocation4], 1
    %475 = vsyncpa %s474, 1
    %476 = vsyncpa [#allocation7], 1
    %477 = vsyncpa [#allocation5], 1
    %s478 = scalar_lea.sflag [#allocation5], 1
    %479 = vsyncpa %s478, 1
    %480 = vsyncpa [#allocation11], 1

</llo_original>
